<compile_context>
chip_gen: v5e
topology: v5e:2x2
jax: 0.10.0
libtpu: 0.0.40
codegen_flags: <defaults>
</compile_context>

<pallas_src>
import functools

import jax
import jax.numpy as jnp
from jax import lax
from jax.experimental import pallas as pl
from jax.experimental.pallas import tpu as pltpu

N_SIGMA = 2                # module default
FOREGROUND_WEIGHT = 1.0    # module default
LANES = 128


def _spatial_emb_kernel(ids_ref,                                   # SMEM (B, max_inst)
                        pred_ref, xym_ref, inst_ref, lab_ref,      # inputs
                        err_ref, mask_ref, scal_ref,               # outputs
                        ex_s, ey_s, seed_s, s0sq_s, s1sq_s, bgrow_s):  # scratch
    b = pl.program_id(0)
    i = pl.program_id(1)
    lane = lax.broadcasted_iota(jnp.int32, (1, LANES), 1)

    # Per-batch planes, computed once per batch element (instance axis is
    # "arbitrary", so i == 0 always runs first for a given b on its core).
    @pl.when(i == 0)
    def _():
        ex = jnp.tanh(pred_ref[0, 0]) + xym_ref[0]        # spatial_emb x  (R, 128)
        ey = jnp.tanh(pred_ref[0, 1]) + xym_ref[1]        # spatial_emb y
        s0 = pred_ref[0, 2]                               # sigma channel 0
        s1 = pred_ref[0, 3]                               # sigma channel 1
        seed = jax.nn.sigmoid(pred_ref[0, 4])             # seed map
        bg = (lab_ref[0] == 0).astype(jnp.float32)        # background mask
        ex_s[...] = ex
        ey_s[...] = ey
        seed_s[...] = seed
        s0sq_s[...] = s0 * s0                             # hoisted squares
        s1sq_s[...] = s1 * s1
        # background seed loss, stashed at lane 3 of a tiny scratch row
        bgrow_s[...] = jnp.where(lane == 3, jnp.sum(seed * seed * bg), 0.0)

    inst_id = ids_ref[b, i]

    @pl.when(inst_id != 0)                                # real instance slot
    def _():
        mask = (inst_ref[0] == inst_id).astype(jnp.float32)
        ex = ex_s[...]
        ey = ey_s[...]
        s0 = pred_ref[0, 2]
        s1 = pred_ref[0, 3]

        # fused first-moment pass: all sums come from one traversal of the
        # plane; var from the sum-of-squares identity (no center-dependent
        # second reduction pass).
        cnt = jnp.sum(mask)
        sum_ex = jnp.sum(ex * mask)
        sum_ey = jnp.sum(ey * mask)
        sum_s0 = jnp.sum(s0 * mask)
        sum_s1 = jnp.sum(s1 * mask)
        sum_s0sq = jnp.sum(s0sq_s[...] * mask)
        sum_s1sq = jnp.sum(s1sq_s[...] * mask)

        inv = 1.0 / jnp.maximum(cnt, 1.0)
        cx = sum_ex * inv
        cy = sum_ey * inv
        m0 = sum_s0 * inv
        m1 = sum_s1 * inv
        var = ((sum_s0sq - m0 * sum_s0) + (sum_s1sq - m1 * sum_s1)) * (inv / N_SIGMA)

        # second pass: dist, foreground seed term, Lovasz errors + mask
        s0e = jnp.exp(10.0 * m0)
        s1e = jnp.exp(10.0 * m1)
        dist = jnp.exp(-(((ex - cx) ** 2) * s0e + ((ey - cy) ** 2) * s1e))
        seed = seed_s[...]
        seed_fg = jnp.sum(((seed - dist) ** 2) * mask)

        signs = 2.0 * mask - 1.0
        err_ref[0, 0] = (1.0 - (2.0 * dist - 1.0) * signs).astype(jnp.bfloat16)
        mask_ref[0, 0] = mask.astype(jnp.bfloat16)

        # lane-padded scalar row: [var, seed_fg, cnt, bg_seed, 0, ...]
        scal_ref[0, 0] = (jnp.where(lane == 0, var, 0.0)
                          + jnp.where(lane == 1, seed_fg, 0.0)
                          + jnp.where(lane == 2, cnt, 0.0)
                          + bgrow_s[...])

    @pl.when(inst_id == 0)                                # empty slot: cheap branch
    def _():
        # output blocks are NOT zero-initialized; write defined constants so
        # the Lovasz glue never reads uninitialized VMEM.
        err_ref[...] = jnp.zeros_like(err_ref)
        mask_ref[...] = jnp.zeros_like(mask_ref)
        scal_ref[0, 0] = bgrow_s[...]                     # keeps bg_seed at lane 3


def _run_kernel(ids, pred, xym, inst, lab, max_inst):
    B, C, R, L = pred.shape
    plane = R * L * 4
    # VMEM budget derived from actual buffer sizes (+ headroom for Mosaic
    # internal scratch) instead of a fixed cap.
    vmem_bytes = (2 * (C + 2 + 1 + 1) * plane        # double-buffered inputs
                  + 2 * (2 * R * L * 2 + L * 4)      # double-buffered bf16 outputs + scal row
                  + 5 * plane + L * 4                # scratch planes + bg row
                  + (16 << 20))                      # headroom
    # TODO(synk): for very large images (>~800x800 on v7x's 64 MiB VMEM) the
    # spatial axis needs an additional R-tile grid axis with a two-pass
    # (moments, then dist/logits) reduction; single resident plane kept here.

    grid_spec = pltpu.PrefetchScalarGridSpec(
        num_scalar_prefetch=1,                       # (B, max_inst) id table -> SMEM
        grid=(B, max_inst),
        in_specs=[
            pl.BlockSpec((1, C, R, L), lambda b, i, ids: (b, 0, 0, 0)),  # prediction
            pl.BlockSpec((2, R, L), lambda b, i, ids: (0, 0, 0)),        # xym buffer
            pl.BlockSpec((1, R, L), lambda b, i, ids: (b, 0, 0)),        # instance map
            pl.BlockSpec((1, R, L), lambda b, i, ids: (b, 0, 0)),        # labels map
        ],
        out_specs=[
            pl.BlockSpec((1, 1, R, L), lambda b, i, ids: (b, i, 0, 0)),  # lovasz errors
            pl.BlockSpec((1, 1, R, L), lambda b, i, ids: (b, i, 0, 0)),  # instance masks
            pl.BlockSpec((1, 1, 1, L), lambda b, i, ids: (b, i, 0, 0)),  # scalar rows
        ],
        scratch_shapes=[
            pltpu.VMEM((R, L), jnp.float32),   # ex
            pltpu.VMEM((R, L), jnp.float32),   # ey
            pltpu.VMEM((R, L), jnp.float32),   # seed
            pltpu.VMEM((R, L), jnp.float32),   # sigma0^2
            pltpu.VMEM((R, L), jnp.float32),   # sigma1^2
            pltpu.VMEM((1, L), jnp.float32),   # background seed row (lane 3)
        ],
    )
    return pl.pallas_call(
        _spatial_emb_kernel,
        out_shape=(
            jax.ShapeDtypeStruct((B, max_inst, R, L), jnp.bfloat16),
            jax.ShapeDtypeStruct((B, max_inst, R, L), jnp.bfloat16),
            jax.ShapeDtypeStruct((B, max_inst, 1, L), jnp.float32),
        ),
        grid_spec=grid_spec,
        compiler_params=pltpu.CompilerParams(
            dimension_semantics=("parallel", "arbitrary"),
            vmem_limit_bytes=int(vmem_bytes),
        ),
    )(ids, pred, xym, inst, lab)


def _unique_ids(inst_flat_b, max_inst):
    """Jittable bounded replacement for torch .unique(): up to max_inst nonzero ids."""
    sentinel = jnp.int32(2147483647)
    x = jnp.where(inst_flat_b == 0, sentinel, inst_flat_b)
    srt = jnp.sort(x)
    pos = jnp.arange(srt.shape[0], dtype=jnp.int32)
    is_new = ((pos == 0) | (srt != jnp.roll(srt, 1))) & (srt != sentinel)
    rank = jnp.cumsum(is_new.astype(jnp.int32)) - 1
    idx = jnp.where(is_new, rank, max_inst)          # non-new / overflow -> dropped
    ids = jnp.zeros((max_inst,), jnp.int32).at[idx].set(srt, mode="drop")
    return ids


def _lovasz_hinge_from_errors(errors, labels):
    # errors = 1 - logits*signs were already formed in the kernel.
    errors = errors.astype(jnp.float32)
    labels = labels.astype(jnp.float32)
    # TODO(synk): full descending sort over H*W has no Pallas TPU primitive;
    # this XLA sort dominates wall-clock for large images.
    neg_sorted, gt_sorted = lax.sort((-errors, labels), num_keys=1)
    errors_sorted = -neg_sorted
    gts = jnp.sum(gt_sorted)
    intersection = gts - jnp.cumsum(gt_sorted)
    union = gts + jnp.cumsum(1.0 - gt_sorted)
    jaccard = 1.0 - intersection / union
    grad = jnp.concatenate([jaccard[:1], jaccard[1:] - jaccard[:-1]])
    return jnp.dot(jax.nn.relu(errors_sorted), grad)


@functools.partial(jax.jit, static_argnames=("max_inst",))
def _loss_impl(prediction, instances, labels, w_inst, w_var, w_seed,
               foreground_weight, *, max_inst):
    B, C, H, W = prediction.shape
    assert C == 2 + N_SIGMA + 1
    HW = H * W
    assert HW % LANES == 0, "H*W must be a multiple of 128 for the lane-dense layout"
    R = HW // LANES

    # coordinate buffer xym as in the module __init__, flattened lane-dense
    xm = jnp.broadcast_to(jnp.linspace(0.0, 1.0, W)[None, :], (H, W))
    ym = jnp.broadcast_to(jnp.linspace(0.0, 1.0, H)[:, None], (H, W))
    xym = jnp.stack([xm, ym], axis=0).astype(jnp.float32).reshape(2, R, LANES)

    pred_flat = prediction.reshape(B, C, R, LANES)
    inst_flat = instances.reshape(B, R, LANES)
    lab_flat = labels.reshape(B, R, LANES)

    # On-device bounded instance-id table (replaces host-side np.unique).
    # TODO(synk): instances beyond max_inst distinct ids are silently dropped.
    ids = jax.vmap(functools.partial(_unique_ids, max_inst=max_inst))(
        instances.reshape(B, HW))

    errors, masks, scal = _run_kernel(ids, pred_flat, xym, inst_flat, lab_flat, max_inst)

    var = scal[:, :, 0, 0]            # (B, max_inst)
    seed_fg = scal[:, :, 0, 1]
    cnt = scal[:, :, 0, 2]
    bg_seed = scal[:, 0, 0, 3]        # per-batch scalar (slot 0 always written)

    valid = (cnt > 0.0).astype(jnp.float32)
    obj_count = jnp.sum(valid, axis=1)

    lov = jax.vmap(jax.vmap(_lovasz_hinge_from_errors))(
        errors.reshape(B, max_inst, HW), masks.reshape(B, max_inst, HW))

    instance_loss = jnp.sum(lov * valid, axis=1)
    var_loss = jnp.sum(var * valid, axis=1)
    seed_loss = bg_seed + foreground_weight * jnp.sum(seed_fg * valid, axis=1)

    denom = jnp.maximum(obj_count, 1.0)
    instance_loss = jnp.where(obj_count > 0, instance_loss / denom, instance_loss)
    var_loss = jnp.where(obj_count > 0, var_loss / denom, var_loss)
    seed_loss = seed_loss / float(H * W)

    per_batch = w_inst * instance_loss + w_var * var_loss + w_seed * seed_loss
    # the reference's `+ prediction.sum() * 0` is a forward-pass no-op; dropped.
    return jnp.mean(per_batch), jnp.float32(0.0)   # iou=False path -> mean_iou = 0


def spatial_emb_loss(prediction, instances, labels, *, max_inst=4,
                     w_inst=1.0, w_var=10.0, w_seed=1.0,
                     foreground_weight=FOREGROUND_WEIGHT):
    """Forward pass of SpatialEmbLoss (to_center=False, n_sigma=2, iou=False)."""
    return _loss_impl(
        jnp.asarray(prediction, jnp.float32),
        jnp.asarray(instances, jnp.int32),
        jnp.asarray(labels, jnp.int32),
        jnp.float32(w_inst), jnp.float32(w_var), jnp.float32(w_seed),
        jnp.float32(foreground_weight), max_inst=int(max_inst))


if __name__ == "__main__":
    key = jax.random.PRNGKey(0)
    B, H, W = 2, 16, 16
    C = 2 + N_SIGMA + 1   # 5 prediction channels

    prediction = jax.random.normal(key, (B, C, H, W), dtype=jnp.float32)

    instances = jnp.zeros((B, H, W), jnp.int32)
    instances = instances.at[0, 2:8, 2:8].set(1)
    instances = instances.at[0, 9:14, 9:15].set(2)
    instances = instances.at[1, 1:6, 8:14].set(3)
    instances = instances.at[1, 10:15, 1:6].set(5)
    labels = (instances > 0).astype(jnp.int32)

    loss, mean_iou = spatial_emb_loss(prediction, instances, labels)
    jax.block_until_ready(loss)
    print("KERNEL_OK")
</pallas_src>

<mosaic_0001>
module attributes {stable_mosaic.version = 11 : i64} {
  func.func @_spatial_emb_kernel(%arg0: i32, %arg1: i32, %arg2: memref<2x4xi32, #tpu.memory_space<smem>>, %arg3: memref<1x5x2x128xf32, #tpu.memory_space<vmem>>, %arg4: memref<2x2x128xf32, #tpu.memory_space<vmem>>, %arg5: memref<1x2x128xi32, #tpu.memory_space<vmem>>, %arg6: memref<1x2x128xi32, #tpu.memory_space<vmem>>, %arg7: memref<1x1x2x128xbf16, #tpu.memory_space<vmem>>, %arg8: memref<1x1x2x128xbf16, #tpu.memory_space<vmem>>, %arg9: memref<1x1x1x128xf32, #tpu.memory_space<vmem>>, %arg10: memref<2x128xf32, #tpu.memory_space<vmem>>, %arg11: memref<2x128xf32, #tpu.memory_space<vmem>>, %arg12: memref<2x128xf32, #tpu.memory_space<vmem>>, %arg13: memref<2x128xf32, #tpu.memory_space<vmem>>, %arg14: memref<2x128xf32, #tpu.memory_space<vmem>>, %arg15: memref<1x128xf32, #tpu.memory_space<vmem>>) attributes {dimension_semantics = [#tpu.dimension_semantics<parallel>, #tpu.dimension_semantics<arbitrary>], iteration_bounds = array<i64: 2, 4>, scalar_prefetch = 1 : i64, scratch_operands = 6 : i64, tpu.core_type = #tpu.core_type<tc>, window_params = [{transform_indices = @transform_0, window_bounds = array<i64: 1, 5, 2, 128>}, {pipeline_mode = #tpu.pipeline_mode<synchronous>, transform_indices = @transform_1, window_bounds = array<i64: 2, 2, 128>}, {transform_indices = @transform_2, window_bounds = array<i64: 1, 2, 128>}, {transform_indices = @transform_3, window_bounds = array<i64: 1, 2, 128>}, {transform_indices = @transform_4, window_bounds = array<i64: 1, 1, 2, 128>}, {transform_indices = @transform_5, window_bounds = array<i64: 1, 1, 2, 128>}, {transform_indices = @transform_6, window_bounds = array<i64: 1, 1, 1, 128>}]} {
    %0 = tpu.iota {dimensions = array<i32: 1>} : vector<1x128xi32>
    %c0_i32 = arith.constant 0 : i32
    %1 = arith.cmpi eq, %arg1, %c0_i32 : i32
    %2 = arith.extui %1 : i1 to i32
    %c0_i32_0 = arith.constant 0 : i32
    %3 = arith.cmpi ne, %2, %c0_i32_0 : i32
    scf.if %3 {
      %c0 = arith.constant 0 : index
      %c0_5 = arith.constant 0 : index
      %c0_6 = arith.constant 0 : index
      %c0_7 = arith.constant 0 : index
      %13 = vector.load %arg3[%c0, %c0_5, %c0_6, %c0_7] : memref<1x5x2x128xf32, #tpu.memory_space<vmem>>, vector<1x1x2x128xf32>
      %14 = vector.shape_cast %13 : vector<1x1x2x128xf32> to vector<2x128xf32>
      %15 = math.tanh %14 : vector<2x128xf32>
      %c0_8 = arith.constant 0 : index
      %c0_9 = arith.constant 0 : index
      %c0_10 = arith.constant 0 : index
      %16 = vector.load %arg4[%c0_8, %c0_9, %c0_10] : memref<2x2x128xf32, #tpu.memory_space<vmem>>, vector<1x2x128xf32>
      %17 = vector.shape_cast %16 : vector<1x2x128xf32> to vector<2x128xf32>
      %18 = arith.addf %15, %17 : vector<2x128xf32>
      %c0_11 = arith.constant 0 : index
      %c1 = arith.constant 1 : index
      %c0_12 = arith.constant 0 : index
      %c0_13 = arith.constant 0 : index
      %19 = vector.load %arg3[%c0_11, %c1, %c0_12, %c0_13] : memref<1x5x2x128xf32, #tpu.memory_space<vmem>>, vector<1x1x2x128xf32>
      %20 = vector.shape_cast %19 : vector<1x1x2x128xf32> to vector<2x128xf32>
      %21 = math.tanh %20 : vector<2x128xf32>
      %c1_14 = arith.constant 1 : index
      %c0_15 = arith.constant 0 : index
      %c0_16 = arith.constant 0 : index
      %22 = vector.load %arg4[%c1_14, %c0_15, %c0_16] : memref<2x2x128xf32, #tpu.memory_space<vmem>>, vector<1x2x128xf32>
      %23 = vector.shape_cast %22 : vector<1x2x128xf32> to vector<2x128xf32>
      %24 = arith.addf %21, %23 : vector<2x128xf32>
      %c0_17 = arith.constant 0 : index
      %c2 = arith.constant 2 : index
      %c0_18 = arith.constant 0 : index
      %c0_19 = arith.constant 0 : index
      %25 = vector.load %arg3[%c0_17, %c2, %c0_18, %c0_19] : memref<1x5x2x128xf32, #tpu.memory_space<vmem>>, vector<1x1x2x128xf32>
      %26 = vector.shape_cast %25 : vector<1x1x2x128xf32> to vector<2x128xf32>
      %c0_20 = arith.constant 0 : index
      %c3 = arith.constant 3 : index
      %c0_21 = arith.constant 0 : index
      %c0_22 = arith.constant 0 : index
      %27 = vector.load %arg3[%c0_20, %c3, %c0_21, %c0_22] : memref<1x5x2x128xf32, #tpu.memory_space<vmem>>, vector<1x1x2x128xf32>
      %28 = vector.shape_cast %27 : vector<1x1x2x128xf32> to vector<2x128xf32>
      %c0_23 = arith.constant 0 : index
      %c4 = arith.constant 4 : index
      %c0_24 = arith.constant 0 : index
      %c0_25 = arith.constant 0 : index
      %29 = vector.load %arg3[%c0_23, %c4, %c0_24, %c0_25] : memref<1x5x2x128xf32, #tpu.memory_space<vmem>>, vector<1x1x2x128xf32>
      %30 = vector.shape_cast %29 : vector<1x1x2x128xf32> to vector<2x128xf32>
      %31 = arith.negf %30 : vector<2x128xf32>
      %32 = math.exp %31 : vector<2x128xf32>
      %cst = arith.constant 1.000000e+00 : f32
      %33 = vector.broadcast %cst : f32 to vector<2x128xf32>
      %34 = arith.addf %33, %32 : vector<2x128xf32>
      %35 = arith.divf %33, %34 : vector<2x128xf32>
      %c0_26 = arith.constant 0 : index
      %c0_27 = arith.constant 0 : index
      %c0_28 = arith.constant 0 : index
      %36 = vector.load %arg6[%c0_26, %c0_27, %c0_28] : memref<1x2x128xi32, #tpu.memory_space<vmem>>, vector<1x2x128xi32>
      %37 = vector.shape_cast %36 : vector<1x2x128xi32> to vector<2x128xi32>
      %c0_i32_29 = arith.constant 0 : i32
      %38 = vector.broadcast %c0_i32_29 : i32 to vector<2x128xi32>
      %39 = arith.cmpi eq, %37, %38 : vector<2x128xi32>
      %40 = arith.extui %39 : vector<2x128xi1> to vector<2x128xi32>
      %41 = arith.sitofp %40 : vector<2x128xi32> to vector<2x128xf32>
      %c0_30 = arith.constant 0 : index
      %c0_31 = arith.constant 0 : index
      %42 = vector.load %arg10[%c0_30, %c0_31] : memref<2x128xf32, #tpu.memory_space<vmem>>, vector<2x128xf32>
      tpu.vector_store %arg10[%c0_30, %c0_31], %18 {strides = array<i32>} : memref<2x128xf32, #tpu.memory_space<vmem>>, vector<2x128xf32>,
      %c0_32 = arith.constant 0 : index
      %c0_33 = arith.constant 0 : index
      %43 = vector.load %arg11[%c0_32, %c0_33] : memref<2x128xf32, #tpu.memory_space<vmem>>, vector<2x128xf32>
      tpu.vector_store %arg11[%c0_32, %c0_33], %24 {strides = array<i32>} : memref<2x128xf32, #tpu.memory_space<vmem>>, vector<2x128xf32>,
      %c0_34 = arith.constant 0 : index
      %c0_35 = arith.constant 0 : index
      %44 = vector.load %arg12[%c0_34, %c0_35] : memref<2x128xf32, #tpu.memory_space<vmem>>, vector<2x128xf32>
      tpu.vector_store %arg12[%c0_34, %c0_35], %35 {strides = array<i32>} : memref<2x128xf32, #tpu.memory_space<vmem>>, vector<2x128xf32>,
      %45 = arith.mulf %26, %26 : vector<2x128xf32>
      %c0_36 = arith.constant 0 : index
      %c0_37 = arith.constant 0 : index
      %46 = vector.load %arg13[%c0_36, %c0_37] : memref<2x128xf32, #tpu.memory_space<vmem>>, vector<2x128xf32>
      tpu.vector_store %arg13[%c0_36, %c0_37], %45 {strides = array<i32>} : memref<2x128xf32, #tpu.memory_space<vmem>>, vector<2x128xf32>,
      %47 = arith.mulf %28, %28 : vector<2x128xf32>
      %c0_38 = arith.constant 0 : index
      %c0_39 = arith.constant 0 : index
      %48 = vector.load %arg14[%c0_38, %c0_39] : memref<2x128xf32, #tpu.memory_space<vmem>>, vector<2x128xf32>
      tpu.vector_store %arg14[%c0_38, %c0_39], %47 {strides = array<i32>} : memref<2x128xf32, #tpu.memory_space<vmem>>, vector<2x128xf32>,
      %c3_i32 = arith.constant 3 : i32
      %49 = vector.broadcast %c3_i32 : i32 to vector<1x128xi32>
      %50 = arith.cmpi eq, %0, %49 : vector<1x128xi32>
      %51 = arith.mulf %35, %35 : vector<2x128xf32>
      %52 = arith.mulf %51, %41 : vector<2x128xf32>
      %53 = vector.shape_cast %52 : vector<2x128xf32> to vector<1x2x128xf32>
      %cst_40 = arith.constant dense<0.000000e+00> : vector<1xf32>
      %54 = vector.multi_reduction <add>, %53, %cst_40 [1, 2] : vector<1x2x128xf32> to vector<1xf32>
      %55 = vector.shape_cast %54 : vector<1xf32> to vector<1x1x1xf32>
      %56 = vector.extract %55[0, 0, 0] : f32 from vector<1x1x1xf32>
      %cst_41 = arith.constant 0.000000e+00 : f32
      %57 = vector.broadcast %56 : f32 to vector<1x128xf32>
      %58 = vector.broadcast %cst_41 : f32 to vector<1x128xf32>
      %59 = arith.select %50, %57, %58 : vector<1x128xi1>, vector<1x128xf32>
      %c0_42 = arith.constant 0 : index
      %c0_43 = arith.constant 0 : index
      %60 = vector.load %arg15[%c0_42, %c0_43] : memref<1x128xf32, #tpu.memory_space<vmem>>, vector<1x128xf32>
      tpu.vector_store %arg15[%c0_42, %c0_43], %59 {strides = array<i32>} : memref<1x128xf32, #tpu.memory_space<vmem>>, vector<1x128xf32>,
    } else {
    }
    %4 = arith.index_cast %arg0 : i32 to index
    %5 = arith.index_cast %arg1 : i32 to index
    %6 = memref.load %arg2[%4, %5] : memref<2x4xi32, #tpu.memory_space<smem>>
    %c0_i32_1 = arith.constant 0 : i32
    %7 = arith.cmpi ne, %6, %c0_i32_1 : i32
    %8 = arith.extui %7 : i1 to i32
    %c0_i32_2 = arith.constant 0 : i32
    %9 = arith.cmpi ne, %8, %c0_i32_2 : i32
    scf.if %9 {
      %c0 = arith.constant 0 : index
      %c0_5 = arith.constant 0 : index
      %c0_6 = arith.constant 0 : index
      %13 = vector.load %arg5[%c0, %c0_5, %c0_6] : memref<1x2x128xi32, #tpu.memory_space<vmem>>, vector<1x2x128xi32>
      %14 = vector.shape_cast %13 : vector<1x2x128xi32> to vector<2x128xi32>
      %15 = vector.broadcast %6 : i32 to vector<2x128xi32>
      %16 = arith.cmpi eq, %14, %15 : vector<2x128xi32>
      %17 = arith.extui %16 : vector<2x128xi1> to vector<2x128xi32>
      %18 = arith.sitofp %17 : vector<2x128xi32> to vector<2x128xf32>
      %c0_7 = arith.constant 0 : index
      %c0_8 = arith.constant 0 : index
      %19 = vector.load %arg10[%c0_7, %c0_8] : memref<2x128xf32, #tpu.memory_space<vmem>>, vector<2x128xf32>
      %c0_9 = arith.constant 0 : index
      %c0_10 = arith.constant 0 : index
      %20 = vector.load %arg11[%c0_9, %c0_10] : memref<2x128xf32, #tpu.memory_space<vmem>>, vector<2x128xf32>
      %c0_11 = arith.constant 0 : index
      %c2 = arith.constant 2 : index
      %c0_12 = arith.constant 0 : index
      %c0_13 = arith.constant 0 : index
      %21 = vector.load %arg3[%c0_11, %c2, %c0_12, %c0_13] : memref<1x5x2x128xf32, #tpu.memory_space<vmem>>, vector<1x1x2x128xf32>
      %22 = vector.shape_cast %21 : vector<1x1x2x128xf32> to vector<2x128xf32>
      %c0_14 = arith.constant 0 : index
      %c3 = arith.constant 3 : index
      %c0_15 = arith.constant 0 : index
      %c0_16 = arith.constant 0 : index
      %23 = vector.load %arg3[%c0_14, %c3, %c0_15, %c0_16] : memref<1x5x2x128xf32, #tpu.memory_space<vmem>>, vector<1x1x2x128xf32>
      %24 = vector.shape_cast %23 : vector<1x1x2x128xf32> to vector<2x128xf32>
      %25 = vector.shape_cast %18 : vector<2x128xf32> to vector<1x2x128xf32>
      %cst = arith.constant dense<0.000000e+00> : vector<1xf32>
      %26 = vector.multi_reduction <add>, %25, %cst [1, 2] : vector<1x2x128xf32> to vector<1xf32>
      %27 = vector.shape_cast %26 : vector<1xf32> to vector<1x1x1xf32>
      %28 = vector.extract %27[0, 0, 0] : f32 from vector<1x1x1xf32>
      %29 = arith.mulf %19, %18 : vector<2x128xf32>
      %30 = vector.shape_cast %29 : vector<2x128xf32> to vector<1x2x128xf32>
      %cst_17 = arith.constant dense<0.000000e+00> : vector<1xf32>
      %31 = vector.multi_reduction <add>, %30, %cst_17 [1, 2] : vector<1x2x128xf32> to vector<1xf32>
      %32 = vector.shape_cast %31 : vector<1xf32> to vector<1x1x1xf32>
      %33 = vector.extract %32[0, 0, 0] : f32 from vector<1x1x1xf32>
      %34 = arith.mulf %20, %18 : vector<2x128xf32>
      %35 = vector.shape_cast %34 : vector<2x128xf32> to vector<1x2x128xf32>
      %cst_18 = arith.constant dense<0.000000e+00> : vector<1xf32>
      %36 = vector.multi_reduction <add>, %35, %cst_18 [1, 2] : vector<1x2x128xf32> to vector<1xf32>
      %37 = vector.shape_cast %36 : vector<1xf32> to vector<1x1x1xf32>
      %38 = vector.extract %37[0, 0, 0] : f32 from vector<1x1x1xf32>
      %39 = arith.mulf %22, %18 : vector<2x128xf32>
      %40 = vector.shape_cast %39 : vector<2x128xf32> to vector<1x2x128xf32>
      %cst_19 = arith.constant dense<0.000000e+00> : vector<1xf32>
      %41 = vector.multi_reduction <add>, %40, %cst_19 [1, 2] : vector<1x2x128xf32> to vector<1xf32>
      %42 = vector.shape_cast %41 : vector<1xf32> to vector<1x1x1xf32>
      %43 = vector.extract %42[0, 0, 0] : f32 from vector<1x1x1xf32>
      %44 = arith.mulf %24, %18 : vector<2x128xf32>
      %45 = vector.shape_cast %44 : vector<2x128xf32> to vector<1x2x128xf32>
      %cst_20 = arith.constant dense<0.000000e+00> : vector<1xf32>
      %46 = vector.multi_reduction <add>, %45, %cst_20 [1, 2] : vector<1x2x128xf32> to vector<1xf32>
      %47 = vector.shape_cast %46 : vector<1xf32> to vector<1x1x1xf32>
      %48 = vector.extract %47[0, 0, 0] : f32 from vector<1x1x1xf32>
      %c0_21 = arith.constant 0 : index
      %c0_22 = arith.constant 0 : index
      %49 = vector.load %arg13[%c0_21, %c0_22] : memref<2x128xf32, #tpu.memory_space<vmem>>, vector<2x128xf32>
      %50 = arith.mulf %49, %18 : vector<2x128xf32>
      %51 = vector.shape_cast %50 : vector<2x128xf32> to vector<1x2x128xf32>
      %cst_23 = arith.constant dense<0.000000e+00> : vector<1xf32>
      %52 = vector.multi_reduction <add>, %51, %cst_23 [1, 2] : vector<1x2x128xf32> to vector<1xf32>
      %53 = vector.shape_cast %52 : vector<1xf32> to vector<1x1x1xf32>
      %54 = vector.extract %53[0, 0, 0] : f32 from vector<1x1x1xf32>
      %c0_24 = arith.constant 0 : index
      %c0_25 = arith.constant 0 : index
      %55 = vector.load %arg14[%c0_24, %c0_25] : memref<2x128xf32, #tpu.memory_space<vmem>>, vector<2x128xf32>
      %56 = arith.mulf %55, %18 : vector<2x128xf32>
      %57 = vector.shape_cast %56 : vector<2x128xf32> to vector<1x2x128xf32>
      %cst_26 = arith.constant dense<0.000000e+00> : vector<1xf32>
      %58 = vector.multi_reduction <add>, %57, %cst_26 [1, 2] : vector<1x2x128xf32> to vector<1xf32>
      %59 = vector.shape_cast %58 : vector<1xf32> to vector<1x1x1xf32>
      %60 = vector.extract %59[0, 0, 0] : f32 from vector<1x1x1xf32>
      %cst_27 = arith.constant 1.000000e+00 : f32
      %61 = arith.maximumf %28, %cst_27 : f32
      %cst_28 = arith.constant 1.000000e+00 : f32
      %62 = arith.divf %cst_28, %61 : f32
      %63 = arith.mulf %33, %62 : f32
      %64 = arith.mulf %38, %62 : f32
      %65 = arith.mulf %43, %62 : f32
      %66 = arith.mulf %48, %62 : f32
      %67 = arith.mulf %65, %43 : f32
      %68 = arith.subf %54, %67 : f32
      %69 = arith.mulf %66, %48 : f32
      %70 = arith.subf %60, %69 : f32
      %71 = arith.addf %68, %70 : f32
      %cst_29 = arith.constant 2.000000e+00 : f32
      %72 = arith.divf %62, %cst_29 : f32
      %73 = arith.mulf %71, %72 : f32
      %cst_30 = arith.constant 1.000000e+01 : f32
      %74 = arith.mulf %cst_30, %65 : f32
      %75 = math.exp %74 : f32
      %cst_31 = arith.constant 1.000000e+01 : f32
      %76 = arith.mulf %cst_31, %66 : f32
      %77 = math.exp %76 : f32
      %78 = vector.broadcast %63 : f32 to vector<2x128xf32>
      %79 = arith.subf %19, %78 : vector<2x128xf32>
      %80 = arith.mulf %79, %79 : vector<2x128xf32>
      %81 = vector.broadcast %75 : f32 to vector<2x128xf32>
      %82 = arith.mulf %80, %81 : vector<2x128xf32>
      %83 = vector.broadcast %64 : f32 to vector<2x128xf32>
      %84 = arith.subf %20, %83 : vector<2x128xf32>
      %85 = arith.mulf %84, %84 : vector<2x128xf32>
      %86 = vector.broadcast %77 : f32 to vector<2x128xf32>
      %87 = arith.mulf %85, %86 : vector<2x128xf32>
      %88 = arith.addf %82, %87 : vector<2x128xf32>
      %cst_32 = arith.constant 0.000000e+00 : f32
      %89 = vector.broadcast %cst_32 : f32 to vector<2x128xf32>
      %90 = arith.subf %89, %88 : vector<2x128xf32>
      %91 = math.exp %90 : vector<2x128xf32>
      %c0_33 = arith.constant 0 : index
      %c0_34 = arith.constant 0 : index
      %92 = vector.load %arg12[%c0_33, %c0_34] : memref<2x128xf32, #tpu.memory_space<vmem>>, vector<2x128xf32>
      %93 = arith.subf %92, %91 : vector<2x128xf32>
      %94 = arith.mulf %93, %93 : vector<2x128xf32>
      %95 = arith.mulf %94, %18 : vector<2x128xf32>
      %96 = vector.shape_cast %95 : vector<2x128xf32> to vector<1x2x128xf32>
      %cst_35 = arith.constant dense<0.000000e+00> : vector<1xf32>
      %97 = vector.multi_reduction <add>, %96, %cst_35 [1, 2] : vector<1x2x128xf32> to vector<1xf32>
      %98 = vector.shape_cast %97 : vector<1xf32> to vector<1x1x1xf32>
      %99 = vector.extract %98[0, 0, 0] : f32 from vector<1x1x1xf32>
      %cst_36 = arith.constant 2.000000e+00 : f32
      %100 = vector.broadcast %cst_36 : f32 to vector<2x128xf32>
      %101 = arith.mulf %100, %18 : vector<2x128xf32>
      %cst_37 = arith.constant 1.000000e+00 : f32
      %102 = vector.broadcast %cst_37 : f32 to vector<2x128xf32>
      %103 = arith.subf %101, %102 : vector<2x128xf32>
      %cst_38 = arith.constant 2.000000e+00 : f32
      %104 = vector.broadcast %cst_38 : f32 to vector<2x128xf32>
      %105 = arith.mulf %104, %91 : vector<2x128xf32>
      %cst_39 = arith.constant 1.000000e+00 : f32
      %106 = vector.broadcast %cst_39 : f32 to vector<2x128xf32>
      %107 = arith.subf %105, %106 : vector<2x128xf32>
      %108 = arith.mulf %107, %103 : vector<2x128xf32>
      %cst_40 = arith.constant 1.000000e+00 : f32
      %109 = vector.broadcast %cst_40 : f32 to vector<2x128xf32>
      %110 = arith.subf %109, %108 : vector<2x128xf32>
      %111 = arith.truncf %110 : vector<2x128xf32> to vector<2x128xbf16>
      %c0_41 = arith.constant 0 : index
      %c0_42 = arith.constant 0 : index
      %c0_43 = arith.constant 0 : index
      %c0_44 = arith.constant 0 : index
      %112 = vector.load %arg7[%c0_41, %c0_42, %c0_43, %c0_44] : memref<1x1x2x128xbf16, #tpu.memory_space<vmem>>, vector<1x1x2x128xbf16>
      %113 = vector.shape_cast %112 : vector<1x1x2x128xbf16> to vector<2x128xbf16>
      %114 = vector.shape_cast %111 : vector<2x128xbf16> to vector<1x1x2x128xbf16>
      tpu.vector_store %arg7[%c0_41, %c0_42, %c0_43, %c0_44], %114 {strides = array<i32>} : memref<1x1x2x128xbf16, #tpu.memory_space<vmem>>, vector<1x1x2x128xbf16>,
      %115 = arith.truncf %18 : vector<2x128xf32> to vector<2x128xbf16>
      %c0_45 = arith.constant 0 : index
      %c0_46 = arith.constant 0 : index
      %c0_47 = arith.constant 0 : index
      %c0_48 = arith.constant 0 : index
      %116 = vector.load %arg8[%c0_45, %c0_46, %c0_47, %c0_48] : memref<1x1x2x128xbf16, #tpu.memory_space<vmem>>, vector<1x1x2x128xbf16>
      %117 = vector.shape_cast %116 : vector<1x1x2x128xbf16> to vector<2x128xbf16>
      %118 = vector.shape_cast %115 : vector<2x128xbf16> to vector<1x1x2x128xbf16>
      tpu.vector_store %arg8[%c0_45, %c0_46, %c0_47, %c0_48], %118 {strides = array<i32>} : memref<1x1x2x128xbf16, #tpu.memory_space<vmem>>, vector<1x1x2x128xbf16>,
      %c0_i32_49 = arith.constant 0 : i32
      %119 = vector.broadcast %c0_i32_49 : i32 to vector<1x128xi32>
      %120 = arith.cmpi eq, %0, %119 : vector<1x128xi32>
      %cst_50 = arith.constant 0.000000e+00 : f32
      %121 = vector.broadcast %73 : f32 to vector<1x128xf32>
      %122 = vector.broadcast %cst_50 : f32 to vector<1x128xf32>
      %123 = arith.select %120, %121, %122 : vector<1x128xi1>, vector<1x128xf32>
      %c1_i32 = arith.constant 1 : i32
      %124 = vector.broadcast %c1_i32 : i32 to vector<1x128xi32>
      %125 = arith.cmpi eq, %0, %124 : vector<1x128xi32>
      %cst_51 = arith.constant 0.000000e+00 : f32
      %126 = vector.broadcast %99 : f32 to vector<1x128xf32>
      %127 = vector.broadcast %cst_51 : f32 to vector<1x128xf32>
      %128 = arith.select %125, %126, %127 : vector<1x128xi1>, vector<1x128xf32>
      %129 = arith.addf %123, %128 : vector<1x128xf32>
      %c2_i32 = arith.constant 2 : i32
      %130 = vector.broadcast %c2_i32 : i32 to vector<1x128xi32>
      %131 = arith.cmpi eq, %0, %130 : vector<1x128xi32>
      %cst_52 = arith.constant 0.000000e+00 : f32
      %132 = vector.broadcast %28 : f32 to vector<1x128xf32>
      %133 = vector.broadcast %cst_52 : f32 to vector<1x128xf32>
      %134 = arith.select %131, %132, %133 : vector<1x128xi1>, vector<1x128xf32>
      %135 = arith.addf %129, %134 : vector<1x128xf32>
      %c0_53 = arith.constant 0 : index
      %c0_54 = arith.constant 0 : index
      %136 = vector.load %arg15[%c0_53, %c0_54] : memref<1x128xf32, #tpu.memory_space<vmem>>, vector<1x128xf32>
      %137 = arith.addf %135, %136 : vector<1x128xf32>
      %c0_55 = arith.constant 0 : index
      %c0_56 = arith.constant 0 : index
      %c0_57 = arith.constant 0 : index
      %c0_58 = arith.constant 0 : index
      %138 = vector.load %arg9[%c0_55, %c0_56, %c0_57, %c0_58] : memref<1x1x1x128xf32, #tpu.memory_space<vmem>>, vector<1x1x1x128xf32>
      %139 = vector.shape_cast %138 : vector<1x1x1x128xf32> to vector<1x128xf32>
      %140 = vector.shape_cast %137 : vector<1x128xf32> to vector<1x1x1x128xf32>
      tpu.vector_store %arg9[%c0_55, %c0_56, %c0_57, %c0_58], %140 {strides = array<i32>} : memref<1x1x1x128xf32, #tpu.memory_space<vmem>>, vector<1x1x1x128xf32>,
    } else {
    }
    %c0_i32_3 = arith.constant 0 : i32
    %10 = arith.cmpi eq, %6, %c0_i32_3 : i32
    %11 = arith.extui %10 : i1 to i32
    %c0_i32_4 = arith.constant 0 : i32
    %12 = arith.cmpi ne, %11, %c0_i32_4 : i32
    scf.if %12 {
      %cst = arith.constant 0.000000e+00 : bf16
      %13 = vector.broadcast %cst : bf16 to vector<1x1x2x128xbf16>
      %c0 = arith.constant 0 : index
      %c0_5 = arith.constant 0 : index
      %c0_6 = arith.constant 0 : index
      %c0_7 = arith.constant 0 : index
      %14 = vector.load %arg7[%c0, %c0_5, %c0_6, %c0_7] : memref<1x1x2x128xbf16, #tpu.memory_space<vmem>>, vector<1x1x2x128xbf16>
      tpu.vector_store %arg7[%c0, %c0_5, %c0_6, %c0_7], %13 {strides = array<i32>} : memref<1x1x2x128xbf16, #tpu.memory_space<vmem>>, vector<1x1x2x128xbf16>,
      %cst_8 = arith.constant 0.000000e+00 : bf16
      %15 = vector.broadcast %cst_8 : bf16 to vector<1x1x2x128xbf16>
      %c0_9 = arith.constant 0 : index
      %c0_10 = arith.constant 0 : index
      %c0_11 = arith.constant 0 : index
      %c0_12 = arith.constant 0 : index
      %16 = vector.load %arg8[%c0_9, %c0_10, %c0_11, %c0_12] : memref<1x1x2x128xbf16, #tpu.memory_space<vmem>>, vector<1x1x2x128xbf16>
      tpu.vector_store %arg8[%c0_9, %c0_10, %c0_11, %c0_12], %15 {strides = array<i32>} : memref<1x1x2x128xbf16, #tpu.memory_space<vmem>>, vector<1x1x2x128xbf16>,
      %c0_13 = arith.constant 0 : index
      %c0_14 = arith.constant 0 : index
      %17 = vector.load %arg15[%c0_13, %c0_14] : memref<1x128xf32, #tpu.memory_space<vmem>>, vector<1x128xf32>
      %c0_15 = arith.constant 0 : index
      %c0_16 = arith.constant 0 : index
      %c0_17 = arith.constant 0 : index
      %c0_18 = arith.constant 0 : index
      %18 = vector.load %arg9[%c0_15, %c0_16, %c0_17, %c0_18] : memref<1x1x1x128xf32, #tpu.memory_space<vmem>>, vector<1x1x1x128xf32>
      %19 = vector.shape_cast %18 : vector<1x1x1x128xf32> to vector<1x128xf32>
      %20 = vector.shape_cast %17 : vector<1x128xf32> to vector<1x1x1x128xf32>
      tpu.vector_store %arg9[%c0_15, %c0_16, %c0_17, %c0_18], %20 {strides = array<i32>} : memref<1x1x1x128xf32, #tpu.memory_space<vmem>>, vector<1x1x1x128xf32>,
    } else {
    }
    return
  }
  func.func @transform_0(%arg0: i32, %arg1: i32, %arg2: memref<2x4xi32, #tpu.memory_space<smem>>) -> (i32, i32, i32, i32) {
    %c0_i32 = arith.constant 0 : i32
    %c0_i32_0 = arith.constant 0 : i32
    %c0_i32_1 = arith.constant 0 : i32
    %c0_i32_2 = arith.constant 0 : i32
    return %arg0, %c0_i32, %c0_i32_0, %c0_i32_1 : i32, i32, i32, i32
  }
  func.func @transform_1(%arg0: i32, %arg1: i32, %arg2: memref<2x4xi32, #tpu.memory_space<smem>>) -> (i32, i32, i32) {
    %c0_i32 = arith.constant 0 : i32
    %c0_i32_0 = arith.constant 0 : i32
    %c0_i32_1 = arith.constant 0 : i32
    %c0_i32_2 = arith.constant 0 : i32
    return %c0_i32, %c0_i32_0, %c0_i32_1 : i32, i32, i32
  }
  func.func @transform_2(%arg0: i32, %arg1: i32, %arg2: memref<2x4xi32, #tpu.memory_space<smem>>) -> (i32, i32, i32) {
    %c0_i32 = arith.constant 0 : i32
    %c0_i32_0 = arith.constant 0 : i32
    %c0_i32_1 = arith.constant 0 : i32
    return %arg0, %c0_i32, %c0_i32_0 : i32, i32, i32
  }
  func.func @transform_3(%arg0: i32, %arg1: i32, %arg2: memref<2x4xi32, #tpu.memory_space<smem>>) -> (i32, i32, i32) {
    %c0_i32 = arith.constant 0 : i32
    %c0_i32_0 = arith.constant 0 : i32
    %c0_i32_1 = arith.constant 0 : i32
    return %arg0, %c0_i32, %c0_i32_0 : i32, i32, i32
  }
  func.func @transform_4(%arg0: i32, %arg1: i32, %arg2: memref<2x4xi32, #tpu.memory_space<smem>>) -> (i32, i32, i32, i32) {
    %c0_i32 = arith.constant 0 : i32
    %c0_i32_0 = arith.constant 0 : i32
    %c0_i32_1 = arith.constant 0 : i32
    return %arg0, %arg1, %c0_i32, %c0_i32_0 : i32, i32, i32, i32
  }
  func.func @transform_5(%arg0: i32, %arg1: i32, %arg2: memref<2x4xi32, #tpu.memory_space<smem>>) -> (i32, i32, i32, i32) {
    %c0_i32 = arith.constant 0 : i32
    %c0_i32_0 = arith.constant 0 : i32
    %c0_i32_1 = arith.constant 0 : i32
    return %arg0, %arg1, %c0_i32, %c0_i32_0 : i32, i32, i32, i32
  }
  func.func @transform_6(%arg0: i32, %arg1: i32, %arg2: memref<2x4xi32, #tpu.memory_space<smem>>) -> (i32, i32, i32, i32) {
    %c0_i32 = arith.constant 0 : i32
    %c0_i32_0 = arith.constant 0 : i32
    %c0_i32_1 = arith.constant 0 : i32
    return %arg0, %arg1, %c0_i32, %c0_i32_0 : i32, i32, i32, i32
  }
}

</mosaic_0001>

<llo_original>
// kernel: _loss_impl.1
$region0: #{_loss_impl.1}
  #allocation0 [shape = 'u32[]', space=smem, size = 0x4, offset = 0x4, fixed_abs, tag = 'smem constant byte address 0x4 - core index']
  #allocation1 [shape = 'u32[72,128]{1,0:T(1,128)}', space=vmem, size = 0x9000, scoped, tag = 'internal scratch']
  #allocation2 [shape = 'f32[2,128]{1,0:T(2,128)}', space=vmem, size = 0x400, scoped, tag = 'scratch operand']
  #allocation3 [shape = 'f32[2,128]{1,0:T(2,128)}', space=vmem, size = 0x400, scoped, tag = 'scratch operand']
  #allocation4 [shape = 'f32[2,128]{1,0:T(2,128)}', space=vmem, size = 0x400, scoped, tag = 'scratch operand']
  #allocation5 [shape = 'f32[2,128]{1,0:T(2,128)}', space=vmem, size = 0x400, scoped, tag = 'scratch operand']
  #allocation6 [shape = 'f32[2,128]{1,0:T(2,128)}', space=vmem, size = 0x400, scoped, tag = 'scratch operand']
  #allocation7 [shape = 'f32[1,128]{1,0:T(1,128)}', space=vmem, size = 0x200, scoped, tag = 'scratch operand']
  #allocation8 [shape = 's32[1]{0}', space=sflag, size = 0x4, scoped, tag = 'scoped memory for _loss_impl.1']
  #allocation9 [shape = 'u8[1024]{0}', space=smem, size = 0x400, scoped, tag = 'prefetched SMEM operand 0']
  %s0 = inlined_call_operand.vmem [shape: s32[2,4], index: 0, kind: input, shape index: {}]
  %s1 = inlined_call_operand.vmem [shape: f32[2,5,2,128], index: 1, kind: input, shape index: {}]
  %s2 = inlined_call_operand.vmem [shape: f32[2,2,128], index: 2, kind: input, shape index: {}]
  %s3 = inlined_call_operand.vmem [shape: s32[2,2,128], index: 3, kind: input, shape index: {}]
  %s4 = inlined_call_operand.vmem [shape: s32[2,2,128], index: 4, kind: input, shape index: {}]
  %s5 = inlined_call_operand.vmem [shape: bf16[2,4,2,128], index: 5, kind: output, shape index: {0}]
  %s6 = inlined_call_operand.vmem [shape: bf16[2,4,2,128], index: 6, kind: output, shape index: {1}]
  %s7 = inlined_call_operand.vmem [shape: f32[2,4,1,128], index: 7, kind: output, shape index: {2}]
  %8 = xla_tuple %s5, %s6, %s7
  %s9 = sld [smem:[#allocation0]]
  $region77: #{_loss_impl.1} parent=0
    _
  %s11 = ssub.s32 1, %s9
  %s12 = scalar_select 0, %s11, %s9
  %s14 = sshll.u32 %s0, 4
  %s15 = int_to_ptr.vmem [resolvable:$true] %s14
  %17 = dma.vmem_to_smem %s15, 32, [#allocation9], [#allocation8]
  %19 = dma.done [#allocation8], 32
  %20 = sfence
  loop: start=0, step=1, limit=10
  $region2: #{_loss_impl.1} parent=0 // loop_pre_header
    _
  $region3: #{_loss_impl.1} parent=0 // loop_header
    %s22 = sphi 0, %s26
    %p23 = scmp.ge.s32.totalorder %s22, 10
    %s29 = sphi 0, %s41
    %s30 = sphi 0, %s37
    %s31 = sphi 0, %s29
    %s32 = sphi 0, %s30
    %s33 = sphi 0, %s31
    %s34 = sphi 0, %s32
    %s44 = sphi 0, %s46
    %s47 = sphi 0, %s44
    %s48 = sphi 0, %s47
    %s64 = sphi 0, %s48
    %s68 = sphi 0, %s68
    %s70 = sphi 0, %s68
    %s71 = sphi 0, %s70
    %s85 = sphi 0, %s71
    %s91 = sphi 0, %s93
    %s94 = sphi 0, %s91
    %s95 = sphi 0, %s94
    %s111 = sphi 0, %s95
    %s117 = sphi 0, %s119
    %s120 = sphi 0, %s117
    %s121 = sphi 0, %s120
    %s137 = sphi 0, %s121
    %s145 = sphi 0, %s147
    %s148 = sphi 0, %s145
    %s149 = sphi 0, %s148
    %s165 = sphi 0, %s149
    %s173 = sphi 0, %s175
    %s176 = sphi 0, %s173
    %s177 = sphi 0, %s176
    %s193 = sphi 0, %s177
    %s201 = sphi 0, %s203
    %s204 = sphi 0, %s201
    %s205 = sphi 0, %s204
    %s221 = sphi 0, %s205
  $region4: #{_loss_impl.1} parent=0 // loop_header_branch
    %25 = sbr.rel (%p23) target = $region8
  $region5: #{_loss_impl.1} parent=0 // loop_body
    %s27 = ssub.s32 %s22, 1
    %s28 = ssub.s32 %s22, 2
    %s35 = sadd.s32 1, %s30
    %p36 = scmp.ge.s32.totalorder %s35, 4
    %s37 = scalar_select %p36, 0, %s35
    %s38 = sadd.s32 1, %s29
    %s39 = scalar_select %p36, %s38, %s29
    %p40 = scmp.ge.s32.totalorder %s39, 2
    %s41 = scalar_select %p40, 0, %s39
    %s42 = ssub.s32 %s29, %s41
    %p43 = scmp.eq.s32.totalorder %s42, 0
    %s45 = sadd.s32 %s44, 1
    %s46 = scalar_select %p43, %s44, %s45
    %p49 = pneg %p43
    %p50 = scmp.eq.s32.totalorder %s22, 7
    %p51 = por %p49, %p50
    %p52 = scmp.ne.s32.totalorder %s44, %s47
    %p53 = scmp.eq.s32.totalorder %s22, 0
    %p54 = por %p52, %p53
    %p55 = scmp.ne.s32.totalorder %s44, %s47
    %p56 = scmp.eq.s32.totalorder %s27, 7
    %p57 = por %p55, %p56
    %p58 = scmp.ne.s32.totalorder %s47, %s48
    %p59 = scmp.eq.s32.totalorder %s27, 0
    %p60 = por %p58, %p59
    %p61 = scmp.ne.s32.totalorder %s47, %s48
    %p62 = scmp.eq.s32.totalorder %s28, 7
    %p63 = por %p61, %p62
    %p65 = scmp.ne.s32.totalorder %s48, %s64
    %p66 = scmp.eq.s32.totalorder %s28, 0
    %p67 = por %p65, %p66
    %s69 = sadd.s32 %s68, 1
    %p72 = scmp.eq.s32.totalorder %s22, 7
    %p73 = scmp.ne.s32.totalorder %s68, %s70
    %p74 = scmp.eq.s32.totalorder %s22, 0
    %p75 = por %p73, %p74
    %p76 = scmp.ne.s32.totalorder %s68, %s70
    %p77 = scmp.eq.s32.totalorder %s27, 7
    %p78 = por %p76, %p77
    %p79 = scmp.ne.s32.totalorder %s70, %s71
    %p80 = scmp.eq.s32.totalorder %s27, 0
    %p81 = por %p79, %p80
    %p82 = scmp.ne.s32.totalorder %s70, %s71
    %p83 = scmp.eq.s32.totalorder %s28, 7
    %p84 = por %p82, %p83
    %p86 = scmp.ne.s32.totalorder %s71, %s85
    %p87 = scmp.eq.s32.totalorder %s28, 0
    %p88 = por %p86, %p87
    %s89 = ssub.s32 %s29, %s41
    %p90 = scmp.eq.s32.totalorder %s89, 0
    %s92 = sadd.s32 %s91, 1
    %s93 = scalar_select %p90, %s91, %s92
    %p96 = pneg %p90
    %p97 = scmp.eq.s32.totalorder %s22, 7
    %p98 = por %p96, %p97
    %p99 = scmp.ne.s32.totalorder %s91, %s94
    %p100 = scmp.eq.s32.totalorder %s22, 0
    %p101 = por %p99, %p100
    %p102 = scmp.ne.s32.totalorder %s91, %s94
    %p103 = scmp.eq.s32.totalorder %s27, 7
    %p104 = por %p102, %p103
    %p105 = scmp.ne.s32.totalorder %s94, %s95
    %p106 = scmp.eq.s32.totalorder %s27, 0
    %p107 = por %p105, %p106
    %p108 = scmp.ne.s32.totalorder %s94, %s95
    %p109 = scmp.eq.s32.totalorder %s28, 7
    %p110 = por %p108, %p109
    %p112 = scmp.ne.s32.totalorder %s95, %s111
    %p113 = scmp.eq.s32.totalorder %s28, 0
    %p114 = por %p112, %p113
    %s115 = ssub.s32 %s29, %s41
    %p116 = scmp.eq.s32.totalorder %s115, 0
    %s118 = sadd.s32 %s117, 1
    %s119 = scalar_select %p116, %s117, %s118
    %p122 = pneg %p116
    %p123 = scmp.eq.s32.totalorder %s22, 7
    %p124 = por %p122, %p123
    %p125 = scmp.ne.s32.totalorder %s117, %s120
    %p126 = scmp.eq.s32.totalorder %s22, 0
    %p127 = por %p125, %p126
    %p128 = scmp.ne.s32.totalorder %s117, %s120
    %p129 = scmp.eq.s32.totalorder %s27, 7
    %p130 = por %p128, %p129
    %p131 = scmp.ne.s32.totalorder %s120, %s121
    %p132 = scmp.eq.s32.totalorder %s27, 0
    %p133 = por %p131, %p132
    %p134 = scmp.ne.s32.totalorder %s120, %s121
    %p135 = scmp.eq.s32.totalorder %s28, 7
    %p136 = por %p134, %p135
    %p138 = scmp.ne.s32.totalorder %s121, %s137
    %p139 = scmp.eq.s32.totalorder %s28, 0
    %p140 = por %p138, %p139
    %s141 = ssub.s32 %s29, %s41
    %s142 = ssub.s32 %s30, %s37
    %s143 = sor.u32 %s141, %s142
    %p144 = scmp.eq.s32.totalorder %s143, 0
    %s146 = sadd.s32 %s145, 1
    %s147 = scalar_select %p144, %s145, %s146
    %p150 = pneg %p144
    %p151 = scmp.eq.s32.totalorder %s22, 7
    %p152 = por %p150, %p151
    %p153 = scmp.ne.s32.totalorder %s145, %s148
    %p154 = scmp.eq.s32.totalorder %s22, 0
    %p155 = por %p153, %p154
    %p156 = scmp.ne.s32.totalorder %s145, %s148
    %p157 = scmp.eq.s32.totalorder %s27, 7
    %p158 = por %p156, %p157
    %p159 = scmp.ne.s32.totalorder %s148, %s149
    %p160 = scmp.eq.s32.totalorder %s27, 0
    %p161 = por %p159, %p160
    %p162 = scmp.ne.s32.totalorder %s148, %s149
    %p163 = scmp.eq.s32.totalorder %s28, 7
    %p164 = por %p162, %p163
    %p166 = scmp.ne.s32.totalorder %s149, %s165
    %p167 = scmp.eq.s32.totalorder %s28, 0
    %p168 = por %p166, %p167
    %s169 = ssub.s32 %s29, %s41
    %s170 = ssub.s32 %s30, %s37
    %s171 = sor.u32 %s169, %s170
    %p172 = scmp.eq.s32.totalorder %s171, 0
    %s174 = sadd.s32 %s173, 1
    %s175 = scalar_select %p172, %s173, %s174
    %p178 = pneg %p172
    %p179 = scmp.eq.s32.totalorder %s22, 7
    %p180 = por %p178, %p179
    %p181 = scmp.ne.s32.totalorder %s173, %s176
    %p182 = scmp.eq.s32.totalorder %s22, 0
    %p183 = por %p181, %p182
    %p184 = scmp.ne.s32.totalorder %s173, %s176
    %p185 = scmp.eq.s32.totalorder %s27, 7
    %p186 = por %p184, %p185
    %p187 = scmp.ne.s32.totalorder %s176, %s177
    %p188 = scmp.eq.s32.totalorder %s27, 0
    %p189 = por %p187, %p188
    %p190 = scmp.ne.s32.totalorder %s176, %s177
    %p191 = scmp.eq.s32.totalorder %s28, 7
    %p192 = por %p190, %p191
    %p194 = scmp.ne.s32.totalorder %s177, %s193
    %p195 = scmp.eq.s32.totalorder %s28, 0
    %p196 = por %p194, %p195
    %s197 = ssub.s32 %s29, %s41
    %s198 = ssub.s32 %s30, %s37
    %s199 = sor.u32 %s197, %s198
    %p200 = scmp.eq.s32.totalorder %s199, 0
    %s202 = sadd.s32 %s201, 1
    %s203 = scalar_select %p200, %s201, %s202
    %p206 = pneg %p200
    %p207 = scmp.eq.s32.totalorder %s22, 7
    %p208 = por %p206, %p207
    %p209 = scmp.ne.s32.totalorder %s201, %s204
    %p210 = scmp.eq.s32.totalorder %s22, 0
    %p211 = por %p209, %p210
    %p212 = scmp.ne.s32.totalorder %s201, %s204
    %p213 = scmp.eq.s32.totalorder %s27, 7
    %p214 = por %p212, %p213
    %p215 = scmp.ne.s32.totalorder %s204, %s205
    %p216 = scmp.eq.s32.totalorder %s27, 0
    %p217 = por %p215, %p216
    %p218 = scmp.ne.s32.totalorder %s204, %s205
    %p219 = scmp.eq.s32.totalorder %s28, 7
    %p220 = por %p218, %p219
    %p222 = scmp.ne.s32.totalorder %s205, %s221
    %p223 = scmp.eq.s32.totalorder %s28, 0
    %p224 = por %p222, %p223
    %p225 = scmp.le.s32.totalorder 1, %s22
    %p226 = scmp.lt.s32.totalorder %s22, 9
    %p227 = pnand %p225, %p226
    %p228 = pneg %p227
    // Predicated region
    $region9: #{_loss_impl.1} parent=5 // pred_check
      _
    $region10: #{_loss_impl.1} parent=5 // pred_check_branch
      %230 = sbr.rel (%p227) target = $region12
    $region11: #{_loss_impl.1} parent=5 // pred_region
      %s231 = ssub.s32 %s22, 1
      // Predicated region
      $region13: #{_loss_impl.1} parent=11 // pred_check
        %p232 = pneg %p81
      $region14: #{_loss_impl.1} parent=11 // pred_check_branch
        %234 = sbr.rel (%p232) target = $region16
      $region15: #{_loss_impl.1} parent=11 // pred_region
        _
      $region16: #{_loss_impl.1} parent=11 // pred_fallthru
        _
    $region12: #{_loss_impl.1} parent=5 // pred_fallthru
      _
    %p235 = scmp.lt.s32.totalorder %s22, 8
    // Predicated region
    $region17: #{_loss_impl.1} parent=5 // pred_check
      %p236 = pneg %p235
    $region18: #{_loss_impl.1} parent=5 // pred_check_branch
      %238 = sbr.rel (%p236) target = $region20
    $region19: #{_loss_impl.1} parent=5 // pred_region
      // Predicated region
      $region21: #{_loss_impl.1} parent=19 // pred_check
        %p239 = pneg %p54
      $region22: #{_loss_impl.1} parent=19 // pred_check_branch
        %241 = sbr.rel (%p239) target = $region24
      $region23: #{_loss_impl.1} parent=19 // pred_region
        %p242 = scmp.lt.s32.totalorder %s29, 1
        %s243 = scalar_select %p242, %s29, 1
        %s244 = smul.addr %s243, 5
        %s245 = smul.addr %s244, 2
        %s246 = scalar_lea.vmem %s1, %s245
      $region24: #{_loss_impl.1} parent=19 // pred_fallthru
        _
      // Predicated region
      $region25: #{_loss_impl.1} parent=19 // pred_check
        %p247 = pneg %p101
      $region26: #{_loss_impl.1} parent=19 // pred_check_branch
        %249 = sbr.rel (%p247) target = $region28
      $region27: #{_loss_impl.1} parent=19 // pred_region
        %p250 = scmp.lt.s32.totalorder %s29, 1
        %s251 = scalar_select %p250, %s29, 1
        %s252 = smul.addr %s251, 2
        %s253 = scalar_lea.vmem %s3, %s252
      $region28: #{_loss_impl.1} parent=19 // pred_fallthru
        _
      // Predicated region
      $region29: #{_loss_impl.1} parent=19 // pred_check
        %p254 = pneg %p127
      $region30: #{_loss_impl.1} parent=19 // pred_check_branch
        %256 = sbr.rel (%p254) target = $region32
      $region31: #{_loss_impl.1} parent=19 // pred_region
        %p257 = scmp.lt.s32.totalorder %s29, 1
        %s258 = scalar_select %p257, %s29, 1
        %s259 = smul.addr %s258, 2
        %s260 = scalar_lea.vmem %s4, %s259
      $region32: #{_loss_impl.1} parent=19 // pred_fallthru
        _
    $region20: #{_loss_impl.1} parent=5 // pred_fallthru
      _
    %p261 = scmp.le.s32.totalorder 1, %s22
    %p262 = scmp.lt.s32.totalorder %s22, 9
    %p263 = pnand %p261, %p262
    %p264 = pneg %p263
    // Predicated region
    $region33: #{_loss_impl.1} parent=5 // pred_check
      _
    $region34: #{_loss_impl.1} parent=5 // pred_check_branch
      %266 = sbr.rel (%p263) target = $region36
    $region35: #{_loss_impl.1} parent=5 // pred_region
      %s267 = ssub.s32 %s22, 1
      %p268 = scmp.lt.s32.totalorder %s31, 1
      %s269 = scalar_select %p268, %s31, 1
      %s270 = smul.addr %s269, 5
      %s271 = smul.addr %s270, 2
      %s272 = scalar_lea.vmem %s1, %s271
      %p273 = pneg %p60
      %p274 = pneg %p57
      %p275 = pneg %p81
      %p276 = pneg %p78
      %p277 = scmp.lt.s32.totalorder %s31, 1
      %s278 = scalar_select %p277, %s31, 1
      %s279 = smul.addr %s278, 2
      %s280 = scalar_lea.vmem %s3, %s279
      %p281 = pneg %p107
      %p282 = pneg %p104
      %p283 = scmp.lt.s32.totalorder %s31, 1
      %s284 = scalar_select %p283, %s31, 1
      %s285 = smul.addr %s284, 2
      %s286 = scalar_lea.vmem %s4, %s285
      %p287 = pneg %p133
      %p288 = pneg %p130
      %p289 = pneg %p161
      %p290 = pneg %p158
      %p291 = scmp.lt.s32.totalorder %s31, 1
      %s292 = scalar_select %p291, %s31, 1
      %p293 = scmp.lt.s32.totalorder %s32, 3
      %s294 = scalar_select %p293, %s32, 3
      %s295 = smul.addr %s292, 4
      %s296 = sadd.s32 %s294, %s295
      %s297 = scalar_lea.vmem %s5, %s296
      %p298 = pneg %p189
      %p299 = pneg %p186
      %p300 = scmp.lt.s32.totalorder %s31, 1
      %s301 = scalar_select %p300, %s31, 1
      %p302 = scmp.lt.s32.totalorder %s32, 3
      %s303 = scalar_select %p302, %s32, 3
      %s304 = smul.addr %s301, 4
      %s305 = sadd.s32 %s303, %s304
      %s306 = scalar_lea.vmem %s6, %s305
      %p307 = pneg %p217
      %p308 = pneg %p214
      %p309 = scmp.lt.s32.totalorder %s31, 1
      %s310 = scalar_select %p309, %s31, 1
      %p311 = scmp.lt.s32.totalorder %s32, 3
      %s312 = scalar_select %p311, %s32, 3
      %s313 = smul.addr %s310, 4
      %s314 = sadd.s32 %s312, %s313
      %s315 = scalar_lea.vmem %s7, %s314
      %p316 = scmp.lt.s32.totalorder %s31, 1
      %s317 = scalar_select %p316, %s31, 1
      %s318 = smul.addr %s317, 5
      %s319 = smul.addr %s318, 2
      %s320 = scalar_lea.vmem %s1, %s319
      %p321 = scmp.lt.s32.totalorder %s31, 1
      %s322 = scalar_select %p321, %s31, 1
      %s323 = smul.addr %s322, 2
      %s324 = scalar_lea.vmem %s3, %s323
      %p325 = scmp.lt.s32.totalorder %s31, 1
      %s326 = scalar_select %p325, %s31, 1
      %s327 = smul.addr %s326, 2
      %s328 = scalar_lea.vmem %s4, %s327
      %p329 = scmp.lt.s32.totalorder %s31, 1
      %s330 = scalar_select %p329, %s31, 1
      %p331 = scmp.lt.s32.totalorder %s32, 3
      %s332 = scalar_select %p331, %s32, 3
      %s333 = smul.addr %s330, 4
      %s334 = sadd.s32 %s332, %s333
      %s335 = scalar_lea.vmem %s5, %s334
      %p336 = scmp.lt.s32.totalorder %s31, 1
      %s337 = scalar_select %p336, %s31, 1
      %p338 = scmp.lt.s32.totalorder %s32, 3
      %s339 = scalar_select %p338, %s32, 3
      %s340 = smul.addr %s337, 4
      %s341 = sadd.s32 %s339, %s340
      %s342 = scalar_lea.vmem %s6, %s341
      %p343 = scmp.lt.s32.totalorder %s31, 1
      %s344 = scalar_select %p343, %s31, 1
      %p345 = scmp.lt.s32.totalorder %s32, 3
      %s346 = scalar_select %p345, %s32, 3
      %s347 = smul.addr %s344, 4
      %s348 = sadd.s32 %s346, %s347
      %s349 = scalar_lea.vmem %s7, %s348
      %v351 = vlaneseq
      %v352 = vand.u32 %v351, 127
      %p353 = scmp.eq.s32.totalorder %s32, 0
      // Predicated region
      $region37: #{_loss_impl.1} parent=35 // pred_check
        %p354 = pneg %p353
      $region38: #{_loss_impl.1} parent=35 // pred_check_branch
        %356 = sbr.rel (%p354) target = $region40
      $region39: #{_loss_impl.1} parent=35 // pred_region
        %v357 = vld [vmem:[%s320] sm:$0x3]
        %v358 = vtanh.pop %v357
        %v359 = vld [vmem:[%s2] sm:$0x3]
        %v360 = vadd.f32 %v358, %v359
        %s361 = scalar_lea.vmem %s320, 2
        %v362 = vld [vmem:[%s361] sm:$0x3]
        %v363 = vtanh.pop %v362
        %s364 = scalar_lea.vmem %s2, 2
        %v365 = vld [vmem:[%s364] sm:$0x3]
        %v366 = vadd.f32 %v363, %v365
        %s367 = scalar_lea.vmem %s320, 4
        %v368 = vld [vmem:[%s367] sm:$0x3]
        %s369 = scalar_lea.vmem %s320, 6
        %v370 = vld [vmem:[%s369] sm:$0x3]
        %s371 = scalar_lea.vmem %s320, 8
        %v372 = vld [vmem:[%s371] sm:$0x3]
        %v373 = vxor.u32 %v372, 2147483648
        %v374 = vmul.f32 %v373, 1.442695
        %v375 = vpow.pop %v374
        %v376 = vadd.f32 %v375, 1.0
        %v377 = vrcp.pop %v376
        %v378 = vmul.f32 %v376, %v377
        %v379 = vsub.f32 1.0, %v378
        %v380 = vmul.f32 %v377, %v379
        %v381 = vadd.f32 %v377, %v380
        %vm382 = vweird.f32 %v376
        %vm383 = vweird.f32 %v377
        %vm384 = vmor %vm382, %vm383
        %v385 = vsel %vm384, %v377, %v381
        %v386 = vand.u32 2147483647, %v376
        %vm387 = vcmp.eq.f32.partialorder %v386, 8.507059e+37
        %v388 = vand.u32 %v376, 2147483648
        %v389 = vor.u32 1.1754944e-38, %v388
        %v390 = vsel %vm387, %v389, %v385
        %v391 = vmul.f32 1.0, %v390
        %v392 = vld [vmem:[%s328] sm:$0x3]
        %vm393 = vcmp.eq.s32.totalorder %v392, 0
        %v394 = vsel %vm393, 1, 0
        %v395 = vcvt.s32.f32 %v394
        %396 = vst [vmem:[#allocation2] sm:$0x3] %v360
        %397 = vst [vmem:[#allocation3] sm:$0x3] %v366
        %398 = vst [vmem:[#allocation4] sm:$0x3] %v391
        %v399 = vmul.f32 %v368, %v368
        %400 = vst [vmem:[#allocation5] sm:$0x3] %v399
        %v401 = vmul.f32 %v370, %v370
        %402 = vst [vmem:[#allocation6] sm:$0x3] %v401
        %vm403 = vcmp.eq.s32.totalorder %v352, 3
        %v404 = vmul.f32 %v391, %v391
        %v405 = vmul.f32 %v404, %v395
        %vm406 = vcmask 1041408
        %v407 = vsel %vm406, %v405, 0.0
        %408 = vadd.xlane.f32.xlu0 %v407
        %v409 = vpop.xlane.xlu0 %408
        %v410 = vrot.slane %v409, 4
        %v411 = vadd.f32 %v409, %v410
        %v412 = vrot.slane %v411, 2
        %v413 = vadd.f32 %v411, %v412
        %v414 = vrot.slane %v413, 1
        %v415 = vadd.f32 %v413, %v414
        %s416 = vtos %v415
        %v417 = vstv %s416
        %v418 = vsel %vm403, %v417, 0.0
        %419 = vst [vmem:[#allocation7] sm:$0x1] %v418
      $region40: #{_loss_impl.1} parent=35 // pred_fallthru
        _
      %s420 = sshra.s32 %s32, 7
      %s421 = sand.u32 %s32, 127
      %s422 = sadd.s32 %s420, %s31
      %s423 = smul.u32 %s422, 128
      %s424 = sshra.s32 %s32, 7
      %s425 = sand.u32 %s32, 127
      %s426 = sadd.s32 %s423, %s425
      %s427 = sld [smem:[#allocation9 + %s426]]
      %p428 = scmp.ne.s32.totalorder %s427, 0
      // Predicated region
      $region41: #{_loss_impl.1} parent=35 // pred_check
        %p429 = pneg %p428
      $region42: #{_loss_impl.1} parent=35 // pred_check_branch
        %431 = sbr.rel (%p429) target = $region44
      $region43: #{_loss_impl.1} parent=35 // pred_region
        %v432 = vld [vmem:[%s324] sm:$0x3]
        %v433 = vstv %s427
        %vm434 = vcmp.eq.s32.totalorder %v432, %v433
        %v435 = vsel %vm434, 1, 0
        %v436 = vcvt.s32.f32 %v435
        %v437 = vld [vmem:[#allocation2] sm:$0x3]
        %v438 = vld [vmem:[#allocation3] sm:$0x3]
        %s439 = scalar_lea.vmem %s320, 4
        %v440 = vld [vmem:[%s439] sm:$0x3]
        %s441 = scalar_lea.vmem %s320, 6
        %v442 = vld [vmem:[%s441] sm:$0x3]
        %vm443 = vcmask 1041408
        %v444 = vsel %vm443, %v436, 0.0
        %445 = vadd.xlane.f32.xlu0 %v444
        %v446 = vpop.xlane.xlu0 %445
        %v447 = vrot.slane %v446, 4
        %v448 = vadd.f32 %v446, %v447
        %v449 = vrot.slane %v448, 2
        %v450 = vadd.f32 %v448, %v449
        %v451 = vrot.slane %v450, 1
        %v452 = vadd.f32 %v450, %v451
        %s453 = vtos %v452
        %v454 = vmul.f32 %v437, %v436
        %v455 = vsel %vm443, %v454, 0.0
        %456 = vadd.xlane.f32.xlu0 %v455
        %v457 = vpop.xlane.xlu0 %456
        %v458 = vrot.slane %v457, 4
        %v459 = vadd.f32 %v457, %v458
        %v460 = vrot.slane %v459, 2
        %v461 = vadd.f32 %v459, %v460
        %v462 = vrot.slane %v461, 1
        %v463 = vadd.f32 %v461, %v462
        %s464 = vtos %v463
        %v465 = vmul.f32 %v438, %v436
        %v466 = vsel %vm443, %v465, 0.0
        %467 = vadd.xlane.f32.xlu0 %v466
        %v468 = vpop.xlane.xlu0 %467
        %v469 = vrot.slane %v468, 4
        %v470 = vadd.f32 %v468, %v469
        %v471 = vrot.slane %v470, 2
        %v472 = vadd.f32 %v470, %v471
        %v473 = vrot.slane %v472, 1
        %v474 = vadd.f32 %v472, %v473
        %s475 = vtos %v474
        %v476 = vmul.f32 %v440, %v436
        %v477 = vsel %vm443, %v476, 0.0
        %478 = vadd.xlane.f32.xlu0 %v477
        %v479 = vpop.xlane.xlu0 %478
        %v480 = vrot.slane %v479, 4
        %v481 = vadd.f32 %v479, %v480
        %v482 = vrot.slane %v481, 2
        %v483 = vadd.f32 %v481, %v482
        %v484 = vrot.slane %v483, 1
        %v485 = vadd.f32 %v483, %v484
        %s486 = vtos %v485
        %v487 = vmul.f32 %v442, %v436
        %v488 = vsel %vm443, %v487, 0.0
        %489 = vadd.xlane.f32.xlu0 %v488
        %v490 = vpop.xlane.xlu0 %489
        %v491 = vrot.slane %v490, 4
        %v492 = vadd.f32 %v490, %v491
        %v493 = vrot.slane %v492, 2
        %v494 = vadd.f32 %v492, %v493
        %v495 = vrot.slane %v494, 1
        %v496 = vadd.f32 %v494, %v495
        %s497 = vtos %v496
        %v498 = vld [vmem:[#allocation5] sm:$0x3]
        %v499 = vmul.f32 %v498, %v436
        %v500 = vsel %vm443, %v499, 0.0
        %501 = vadd.xlane.f32.xlu0 %v500
        %v502 = vpop.xlane.xlu0 %501
        %v503 = vrot.slane %v502, 4
        %v504 = vadd.f32 %v502, %v503
        %v505 = vrot.slane %v504, 2
        %v506 = vadd.f32 %v504, %v505
        %v507 = vrot.slane %v506, 1
        %v508 = vadd.f32 %v506, %v507
        %s509 = vtos %v508
        %v510 = vld [vmem:[#allocation6] sm:$0x3]
        %v511 = vmul.f32 %v510, %v436
        %v512 = vsel %vm443, %v511, 0.0
        %513 = vadd.xlane.f32.xlu0 %v512
        %v514 = vpop.xlane.xlu0 %513
        %v515 = vrot.slane %v514, 4
        %v516 = vadd.f32 %v514, %v515
        %v517 = vrot.slane %v516, 2
        %v518 = vadd.f32 %v516, %v517
        %v519 = vrot.slane %v518, 1
        %v520 = vadd.f32 %v518, %v519
        %s521 = vtos %v520
        %s522 = smax.f32 %s453, 1.0
        %v523 = vstv %s522
        %v524 = vrcp.pop %v523
        %v525 = vmul.f32 %v523, %v524
        %v526 = vsub.f32 1.0, %v525
        %v527 = vmul.f32 %v524, %v526
        %v528 = vadd.f32 %v524, %v527
        %vm529 = vweird.f32 %v523
        %vm530 = vweird.f32 %v524
        %vm531 = vmor %vm529, %vm530
        %v532 = vsel %vm531, %v524, %v528
        %v533 = vand.u32 2147483647, %v523
        %vm534 = vcmp.eq.f32.partialorder %v533, 8.507059e+37
        %v535 = vand.u32 %v523, 2147483648
        %v536 = vor.u32 1.1754944e-38, %v535
        %v537 = vsel %vm534, %v536, %v532
        %s538 = vtos %v537
        %s539 = smul.f32 %s464, %s538
        %s540 = smul.f32 %s475, %s538
        %s541 = smul.f32 %s486, %s538
        %s542 = smul.f32 %s497, %s538
        %s543 = smul.f32 %s541, %s486
        %s544 = ssub.f32 %s509, %s543
        %s545 = smul.f32 %s542, %s497
        %s546 = ssub.f32 %s521, %s545
        %s547 = sadd.f32 %s544, %s546
        %v548 = vrcp.pop 2.0
        %v549 = vmul.f32 2.0, %v548
        %v550 = vsub.f32 1.0, %v549
        %v551 = vmul.f32 %v548, %v550
        %v552 = vadd.f32 %v548, %v551
        %vm553 = vweird.f32 %v548
        %v554 = vsel %vm553, %v548, %v552
        %s555 = vtos %v554
        %s556 = smul.f32 %s538, %s555
        %s557 = smul.f32 %s547, %s556
        %s558 = smul.f32 %s541, 10.0
        %v559 = vstv %s558
        %v560 = vmul.f32 %v559, 1.442695
        %v561 = vpow.pop %v560
        %s562 = vtos %v561
        %s563 = smul.f32 %s542, 10.0
        %v564 = vstv %s563
        %v565 = vmul.f32 %v564, 1.442695
        %v566 = vpow.pop %v565
        %s567 = vtos %v566
        %v568 = vstv %s539
        %v569 = vsub.f32 %v437, %v568
        %v570 = vmul.f32 %v569, %v569
        %v571 = vstv %s562
        %v572 = vmul.f32 %v570, %v571
        %v573 = vstv %s540
        %v574 = vsub.f32 %v438, %v573
        %v575 = vmul.f32 %v574, %v574
        %v576 = vstv %s567
        %v577 = vmul.f32 %v575, %v576
        %v578 = vadd.f32 %v572, %v577
        %v579 = vsub.f32 0.0, %v578
        %v580 = vmul.f32 %v579, 1.442695
        %v581 = vpow.pop %v580
        %v582 = vld [vmem:[#allocation4] sm:$0x3]
        %v583 = vsub.f32 %v582, %v581
        %v584 = vmul.f32 %v583, %v583
        %v585 = vmul.f32 %v584, %v436
        %v586 = vsel %vm443, %v585, 0.0
        %587 = vadd.xlane.f32.xlu0 %v586
        %v588 = vpop.xlane.xlu0 %587
        %v589 = vrot.slane %v588, 4
        %v590 = vadd.f32 %v588, %v589
        %v591 = vrot.slane %v590, 2
        %v592 = vadd.f32 %v590, %v591
        %v593 = vrot.slane %v592, 1
        %v594 = vadd.f32 %v592, %v593
        %s595 = vtos %v594
        %v596 = vmul.f32 %v436, 2.0
        %v597 = vsub.f32 %v596, 1.0
        %v598 = vmul.f32 %v581, 2.0
        %v599 = vsub.f32 %v598, 1.0
        %v600 = vmul.f32 %v599, %v597
        %v601 = vsub.f32 1.0, %v600
        %v602 = vpack.c.bf16 %v601, %v601
        %603 = vst [vmem:[%s335] sm:$0x1] %v602
        %v604 = vpack.c.bf16 %v436, %v436
        %605 = vst [vmem:[%s342] sm:$0x1] %v604
        %vm606 = vcmp.eq.s32.totalorder %v352, 0
        %v607 = vstv %s557
        %v608 = vsel %vm606, %v607, 0.0
        %vm609 = vcmp.eq.s32.totalorder %v352, 1
        %v610 = vstv %s595
        %v611 = vsel %vm609, %v610, 0.0
        %v612 = vadd.f32 %v608, %v611
        %vm613 = vcmp.eq.s32.totalorder %v352, 2
        %v614 = vstv %s453
        %v615 = vsel %vm613, %v614, 0.0
        %v616 = vadd.f32 %v612, %v615
        %v617 = vld [vmem:[#allocation7] sm:$0x1]
        %v618 = vadd.f32 %v616, %v617
        %619 = vst [vmem:[%s349] sm:$0x1] %v618
      $region44: #{_loss_impl.1} parent=35 // pred_fallthru
        _
      %p620 = scmp.eq.s32.totalorder %s427, 0
      // Predicated region
      $region45: #{_loss_impl.1} parent=35 // pred_check
        %p621 = pneg %p620
      $region46: #{_loss_impl.1} parent=35 // pred_check_branch
        %623 = sbr.rel (%p621) target = $region48
      $region47: #{_loss_impl.1} parent=35 // pred_region
        %624 = vst [vmem:[%s335] sm:$0x1] 0
        %625 = vst [vmem:[%s342] sm:$0x1] 0
        %v626 = vld [vmem:[#allocation7] sm:$0x1]
        %627 = vst [vmem:[%s349] sm:$0x1] %v626
      $region48: #{_loss_impl.1} parent=35 // pred_fallthru
        _
      %p628 = scmp.lt.s32.totalorder %s31, 1
      %s629 = scalar_select %p628, %s31, 1
      %p630 = scmp.lt.s32.totalorder %s32, 3
      %s631 = scalar_select %p630, %s32, 3
      %s632 = smul.addr %s629, 4
      %s633 = sadd.s32 %s631, %s632
      %s634 = scalar_lea.vmem %s5, %s633
      %p635 = scmp.lt.s32.totalorder %s31, 1
      %s636 = scalar_select %p635, %s31, 1
      %p637 = scmp.lt.s32.totalorder %s32, 3
      %s638 = scalar_select %p637, %s32, 3
      %s639 = smul.addr %s636, 4
      %s640 = sadd.s32 %s638, %s639
      %s641 = scalar_lea.vmem %s6, %s640
      %p642 = scmp.lt.s32.totalorder %s31, 1
      %s643 = scalar_select %p642, %s31, 1
      %p644 = scmp.lt.s32.totalorder %s32, 3
      %s645 = scalar_select %p644, %s32, 3
      %s646 = smul.addr %s643, 4
      %s647 = sadd.s32 %s645, %s646
      %s648 = scalar_lea.vmem %s7, %s647
      // Predicated region
      $region49: #{_loss_impl.1} parent=35 // pred_check
        %p649 = pneg %p158
      $region50: #{_loss_impl.1} parent=35 // pred_check_branch
        %651 = sbr.rel (%p649) target = $region52
      $region51: #{_loss_impl.1} parent=35 // pred_region
        _
      $region52: #{_loss_impl.1} parent=35 // pred_fallthru
        _
      // Predicated region
      $region53: #{_loss_impl.1} parent=35 // pred_check
        %p652 = pneg %p186
      $region54: #{_loss_impl.1} parent=35 // pred_check_branch
        %654 = sbr.rel (%p652) target = $region56
      $region55: #{_loss_impl.1} parent=35 // pred_region
        _
      $region56: #{_loss_impl.1} parent=35 // pred_fallthru
        _
      // Predicated region
      $region57: #{_loss_impl.1} parent=35 // pred_check
        %p655 = pneg %p214
      $region58: #{_loss_impl.1} parent=35 // pred_check_branch
        %657 = sbr.rel (%p655) target = $region60
      $region59: #{_loss_impl.1} parent=35 // pred_region
        _
      $region60: #{_loss_impl.1} parent=35 // pred_fallthru
        _
    $region36: #{_loss_impl.1} parent=5 // pred_fallthru
      _
    %p658 = scmp.le.s32.totalorder 2, %s22
    // Predicated region
    $region61: #{_loss_impl.1} parent=5 // pred_check
      %p659 = pneg %p658
    $region62: #{_loss_impl.1} parent=5 // pred_check_branch
      %661 = sbr.rel (%p659) target = $region64
    $region63: #{_loss_impl.1} parent=5 // pred_region
      %s662 = ssub.s32 %s22, 2
      // Predicated region
      $region65: #{_loss_impl.1} parent=63 // pred_check
        %p663 = pneg %p164
      $region66: #{_loss_impl.1} parent=63 // pred_check_branch
        %665 = sbr.rel (%p663) target = $region68
      $region67: #{_loss_impl.1} parent=63 // pred_region
        %p666 = scmp.lt.s32.totalorder %s33, 1
        %s667 = scalar_select %p666, %s33, 1
        %p668 = scmp.lt.s32.totalorder %s34, 3
        %s669 = scalar_select %p668, %s34, 3
        %s670 = smul.addr %s667, 4
        %s671 = sadd.s32 %s669, %s670
        %s672 = scalar_lea.vmem %s5, %s671
      $region68: #{_loss_impl.1} parent=63 // pred_fallthru
        _
      // Predicated region
      $region69: #{_loss_impl.1} parent=63 // pred_check
        %p673 = pneg %p192
      $region70: #{_loss_impl.1} parent=63 // pred_check_branch
        %675 = sbr.rel (%p673) target = $region72
      $region71: #{_loss_impl.1} parent=63 // pred_region
        %p676 = scmp.lt.s32.totalorder %s33, 1
        %s677 = scalar_select %p676, %s33, 1
        %p678 = scmp.lt.s32.totalorder %s34, 3
        %s679 = scalar_select %p678, %s34, 3
        %s680 = smul.addr %s677, 4
        %s681 = sadd.s32 %s679, %s680
        %s682 = scalar_lea.vmem %s6, %s681
      $region72: #{_loss_impl.1} parent=63 // pred_fallthru
        _
      // Predicated region
      $region73: #{_loss_impl.1} parent=63 // pred_check
        %p683 = pneg %p220
      $region74: #{_loss_impl.1} parent=63 // pred_check_branch
        %685 = sbr.rel (%p683) target = $region76
      $region75: #{_loss_impl.1} parent=63 // pred_region
        %p686 = scmp.lt.s32.totalorder %s33, 1
        %s687 = scalar_select %p686, %s33, 1
        %p688 = scmp.lt.s32.totalorder %s34, 3
        %s689 = scalar_select %p688, %s34, 3
        %s690 = smul.addr %s687, 4
        %s691 = sadd.s32 %s689, %s690
        %s692 = scalar_lea.vmem %s7, %s691
      $region76: #{_loss_impl.1} parent=63 // pred_fallthru
        _
    $region64: #{_loss_impl.1} parent=5 // pred_fallthru
      _
  $region6: #{_loss_impl.1} parent=0 // loop_footer
    %s26 = sadd.s32 1, %s22
  $region7: #{_loss_impl.1} parent=0 // loop_footer_branch
    %21 = sbr.rel target = $region3
  $region8: #{_loss_impl.1} parent=0 // loop_exit
    _

</llo_original>
